<compile_context>
chip_gen: v5e
topology: v5e:2x2
jax: 0.10.0
libtpu: 0.0.40
codegen_flags: <defaults>
</compile_context>

<pallas_src>
import jax
import jax.numpy as jnp
from jax.experimental import pallas as pl
from jax.experimental.pallas import tpu as pltpu


def _round_up(x, m):
    return ((x + m - 1) // m) * m


def _vmem_capacity_bytes():
    try:
        cap = getattr(pltpu.get_tpu_info(), "vmem_capacity_bytes", None)
        if cap:
            return int(cap)
    except Exception:
        pass
    return 64 * 1024 * 1024  # conservative (v7x per-core physical VMEM)


# -----------------------------------------------------------------------------
# Kernels
# -----------------------------------------------------------------------------

def _matmul_step(x_ref, w_ref, acc_ref):
    @pl.when(pl.program_id(2) == 0)
    def _():
        acc_ref[...] = jnp.zeros_like(acc_ref)

    # int8 -> compute-dtype dequant stays in-kernel: HBM traffic stays int8.
    # Weight tile is already (tk, tn), so this is a plain (non-transposed)
    # MXU contraction.
    w = w_ref[...].astype(x_ref.dtype)                       # (tk, tn)
    acc_ref[...] += jnp.dot(x_ref[...], w,                   # (tm, tn) f32 acc
                            preferred_element_type=jnp.float32)


def _w8a16_kernel_bias(x_ref, w_ref, s_ref, b_ref, o_ref, acc_ref):
    _matmul_step(x_ref, w_ref, acc_ref)

    @pl.when(pl.program_id(2) == pl.num_programs(2) - 1)
    def _():
        # f32 epilogue on the f32 accumulator; cast only at the store.
        o_ref[...] = (acc_ref[...] * s_ref[...] + b_ref[...]).astype(o_ref.dtype)


def _w8a16_kernel_nobias(x_ref, w_ref, s_ref, o_ref, acc_ref):
    _matmul_step(x_ref, w_ref, acc_ref)

    @pl.when(pl.program_id(2) == pl.num_programs(2) - 1)
    def _():
        o_ref[...] = (acc_ref[...] * s_ref[...]).astype(o_ref.dtype)


# -----------------------------------------------------------------------------
# One-time weight packing (hoist out of the hot path)
# -----------------------------------------------------------------------------

def pack_w8a16(int8_weights, scales, bias=None, *, tn=1024, tk=1024):
    """Transpose int8 weight to (K, N), pad to tile multiples, f32 scales/bias.

    Do this once at load time; w8a16_linear_packed then runs with zero per-call
    weight-side HBM copies.
    """
    N, K = int8_weights.shape
    tn = min(tn, _round_up(N, 128))
    tk = min(tk, _round_up(K, 128))
    Np, Kp = _round_up(N, tn), _round_up(K, tk)

    w_t = jnp.swapaxes(int8_weights, 0, 1)                   # (K, N) int8
    if (Kp, Np) != (K, N):
        w_t = jnp.pad(w_t, ((0, Kp - K), (0, Np - N)))        # zero K-pad exact

    s = scales.reshape(1, N).astype(jnp.float32)
    if Np != N:
        s = jnp.pad(s, ((0, 0), (0, Np - N)))

    b = None
    if bias is not None:
        if bias.size != N:
            raise ValueError(f"bias has {bias.size} elements, expected {N}")
        b = bias.reshape(1, N).astype(jnp.float32)
        if Np != N:
            b = jnp.pad(b, ((0, 0), (0, Np - N)))

    return dict(weight=w_t, scales=s, bias=b, N=N, K=K, tn=tn, tk=tk)


# -----------------------------------------------------------------------------
# Forward
# -----------------------------------------------------------------------------

def w8a16_linear_packed(x, packed, *, tm=512, downcast_to_bf16=True):
    """output = (x @ int8_weights.astype(x.dtype).T) * scales (+ bias)."""
    w, s, b = packed["weight"], packed["scales"], packed["bias"]
    N, K, tn, tk = packed["N"], packed["K"], packed["tn"], packed["tk"]
    Kp, Np = w.shape

    orig_shape = x.shape
    if orig_shape[-1] != K:
        raise ValueError(f"x last dim {orig_shape[-1]} != in_features {K}")
    out_dtype = x.dtype
    x2d = x.reshape(-1, K)
    M = x2d.shape[0]

    # bf16 MXU path: int8 weights are exact in bf16; only activation rounding
    # changes, accumulation and epilogue stay f32.
    compute_dtype = x.dtype
    if downcast_to_bf16 and x.dtype == jnp.float32:
        compute_dtype = jnp.bfloat16
        x2d = x2d.astype(compute_dtype)

    m_align = 16 if compute_dtype == jnp.bfloat16 else 8
    tm = min(tm, _round_up(M, m_align))
    Mp = _round_up(M, tm)
    if (Mp, Kp) != (M, K):
        x2d = jnp.pad(x2d, ((0, Mp - M), (0, Kp - K)))

    # v7x has 2 TensorCores: if the M axis is a single block, keep >= 2 blocks
    # on the N axis (only when the halved tn stays 128-aligned and divides Np).
    if Mp // tm == 1 and Np // tn == 1 and tn % 256 == 0:
        tn //= 2

    m_blocks, n_blocks, k_blocks = Mp // tm, Np // tn, Kp // tk

    # Decode/small-M regime: deepen pipelining on the int8 weight stream.
    deep_w = (m_blocks == 1) and (n_blocks * k_blocks >= 3)

    def _weight_spec():
        idx = lambda i, j, k: (k, j)
        if deep_w and hasattr(pl, "Buffered"):
            try:
                return pl.BlockSpec((tk, tn), idx, pipeline_mode=pl.Buffered(3))
            except TypeError:
                pass
        return pl.BlockSpec((tk, tn), idx)

    args = [x2d, w, s]
    in_specs = [
        pl.BlockSpec((tm, tk), lambda i, j, k: (i, k)),       # activations
        _weight_spec(),                                       # int8 (K,N) weight
        pl.BlockSpec((1, tn), lambda i, j, k: (0, j)),        # f32 scales
    ]
    if b is not None:
        args.append(b)
        in_specs.append(pl.BlockSpec((1, tn), lambda i, j, k: (0, j)))
        kernel = _w8a16_kernel_bias
    else:
        kernel = _w8a16_kernel_nobias

    # VMEM budget: double-buffered tiles + f32 accumulator, capped at 75% of
    # the physical capacity (~48 MiB on v7x, more on v5e/v6e).
    x_item = jnp.dtype(compute_dtype).itemsize
    o_item = jnp.dtype(out_dtype).itemsize
    wbuf = 3 if deep_w else 2
    est = (2 * tm * tk * x_item          # x tiles
           + wbuf * tk * tn              # int8 weight tiles
           + 2 * tm * tn * o_item        # output tiles
           + tm * tn * 4                 # f32 accumulator
           + 4 * 2 * tn * 4)             # scales / bias
    vmem_limit = int(min(max(2 * est, 32 * 1024 * 1024),
                         int(0.75 * _vmem_capacity_bytes())))

    out2d = pl.pallas_call(
        kernel,
        out_shape=jax.ShapeDtypeStruct((Mp, Np), out_dtype),
        grid_spec=pltpu.PrefetchScalarGridSpec(
            num_scalar_prefetch=0,
            grid=(m_blocks, n_blocks, k_blocks),
            in_specs=in_specs,
            out_specs=pl.BlockSpec((tm, tn), lambda i, j, k: (i, j)),
            scratch_shapes=[pltpu.VMEM((tm, tn), jnp.float32)],
        ),
        compiler_params=pltpu.CompilerParams(
            dimension_semantics=("parallel", "parallel", "arbitrary"),
            vmem_limit_bytes=vmem_limit),
    )(*args)

    out2d = out2d[:M, :N]
    return out2d.reshape(*orig_shape[:-1], N)


def w8a16_linear(x, int8_weights, scales, bias=None, *,
                 tm=512, tn=1024, tk=1024, downcast_to_bf16=True):
    """Convenience wrapper (packs weights per call; hoist pack_w8a16 in real use)."""
    packed = pack_w8a16(int8_weights, scales, bias, tn=tn, tk=tk)
    return w8a16_linear_packed(x, packed, tm=tm, downcast_to_bf16=downcast_to_bf16)


def w8a16_reference(x, int8_weights, scales, bias=None):
    out = jnp.matmul(x, int8_weights.astype(x.dtype).T) * scales.astype(x.dtype)
    if bias is not None:
        out = out + bias.astype(x.dtype)
    return out


def _assert_close(out, ref, tol):
    # bf16 activation rounding -> compare against the f32 reference with a
    # tolerance relative to the output magnitude.
    out32 = out.astype(jnp.float32)
    ref32 = ref.astype(jnp.float32)
    err = float(jnp.max(jnp.abs(out32 - ref32)))
    scale = float(jnp.max(jnp.abs(ref32))) + 1e-6
    assert err <= tol * scale, f"max abs err {err} vs scale {scale} (tol {tol})"


if __name__ == "__main__":
    # Module-equivalent deterministic synthetic parameters (no checkpoint).
    key = jax.random.PRNGKey(0)
    kw, ks, kb, kx, kw2, ks2, kx2 = jax.random.split(key, 7)

    # Case 1: bias, aligned shapes; pre-packed weights (hot-path usage).
    in_feature, out_feature = 128, 256
    batch, seq = 2, 8
    int8_weights = jax.random.randint(
        kw, (out_feature, in_feature), -128, 127, dtype=jnp.int8)
    scales = jax.random.normal(ks, (out_feature,), dtype=jnp.float32)
    bias = jax.random.normal(kb, (1, out_feature), dtype=jnp.float32)
    x = jax.random.normal(kx, (batch, seq, in_feature), dtype=jnp.float32)

    packed = pack_w8a16(int8_weights, scales, bias)   # one-time weight prep
    out = jax.block_until_ready(w8a16_linear_packed(x, packed))
    ref = w8a16_reference(x, int8_weights, scales, bias)
    assert out.shape == (batch, seq, out_feature)
    assert out.dtype == x.dtype
    _assert_close(out, ref, 2e-2)

    # Case 2: no bias, non-128-multiple shapes (exercises the padding path).
    in2, out2f = 96, 200
    w2 = jax.random.randint(kw2, (out2f, in2), -128, 127, dtype=jnp.int8)
    s2 = jax.random.normal(ks2, (out2f,), dtype=jnp.float32)
    x2 = jax.random.normal(kx2, (3, 5, in2), dtype=jnp.float32)

    o2 = jax.block_until_ready(w8a16_linear(x2, w2, s2, None))
    r2 = w8a16_reference(x2, w2, s2, None)
    assert o2.shape == (3, 5, out2f)
    _assert_close(o2, r2, 2e-2)

    print("KERNEL_OK")
</pallas_src>

<mosaic_0001>
module attributes {stable_mosaic.version = 11 : i64} {
  func.func @_w8a16_kernel_bias(%arg0: i32, %arg1: i32, %arg2: i32, %arg3: memref<16x128xbf16, #tpu.memory_space<vmem>>, %arg4: memref<128x128xi8, #tpu.memory_space<vmem>>, %arg5: memref<1x128xf32, #tpu.memory_space<vmem>>, %arg6: memref<1x128xf32, #tpu.memory_space<vmem>>, %arg7: memref<16x128xf32, #tpu.memory_space<vmem>>, %arg8: memref<16x128xf32, #tpu.memory_space<vmem>>) attributes {dimension_semantics = [#tpu.dimension_semantics<parallel>, #tpu.dimension_semantics<parallel>, #tpu.dimension_semantics<arbitrary>], iteration_bounds = array<i64: 1, 2, 1>, scalar_prefetch = 0 : i64, scratch_operands = 1 : i64, tpu.core_type = #tpu.core_type<tc>, window_params = [{transform_indices = @transform_0, window_bounds = array<i64: 16, 128>}, {transform_indices = @transform_1, window_bounds = array<i64: 128, 128>}, {transform_indices = @transform_2, window_bounds = array<i64: 1, 128>}, {transform_indices = @transform_3, window_bounds = array<i64: 1, 128>}, {transform_indices = @transform_4, window_bounds = array<i64: 16, 128>}]} {
    %c0_i32 = arith.constant 0 : i32
    %0 = arith.cmpi eq, %arg2, %c0_i32 : i32
    %1 = arith.extui %0 : i1 to i32
    %c0_i32_0 = arith.constant 0 : i32
    %2 = arith.cmpi ne, %1, %c0_i32_0 : i32
    scf.if %2 {
      %cst_10 = arith.constant 0.000000e+00 : f32
      %13 = vector.broadcast %cst_10 : f32 to vector<16x128xf32>
      %c0_11 = arith.constant 0 : index
      %c0_12 = arith.constant 0 : index
      %14 = vector.load %arg8[%c0_11, %c0_12] : memref<16x128xf32, #tpu.memory_space<vmem>>, vector<16x128xf32>
      tpu.vector_store %arg8[%c0_11, %c0_12], %13 {strides = array<i32>} : memref<16x128xf32, #tpu.memory_space<vmem>>, vector<16x128xf32>,
    } else {
    }
    %c0 = arith.constant 0 : index
    %c0_1 = arith.constant 0 : index
    %3 = vector.load %arg4[%c0, %c0_1] : memref<128x128xi8, #tpu.memory_space<vmem>>, vector<128x128xi8>
    %4 = arith.sitofp %3 : vector<128x128xi8> to vector<128x128xbf16>
    %c0_2 = arith.constant 0 : index
    %c0_3 = arith.constant 0 : index
    %5 = vector.load %arg8[%c0_2, %c0_3] : memref<16x128xf32, #tpu.memory_space<vmem>>, vector<16x128xf32>
    %c0_4 = arith.constant 0 : index
    %c0_5 = arith.constant 0 : index
    %6 = vector.load %arg3[%c0_4, %c0_5] : memref<16x128xbf16, #tpu.memory_space<vmem>>, vector<16x128xbf16>
    %cst = arith.constant dense<0.000000e+00> : vector<16x128xf32>
    %7 = tpu.matmul %6, %4, %cst {dimension_numbers = #tpu.dot_dimension_numbers<[1], [0], [0], [1], [0, 0, 1, 1], [], []>} : vector<16x128xbf16>, vector<128x128xbf16>, vector<16x128xf32> -> vector<16x128xf32>
    %8 = arith.addf %5, %7 : vector<16x128xf32>
    %c0_6 = arith.constant 0 : index
    %c0_7 = arith.constant 0 : index
    %9 = vector.load %arg8[%c0_6, %c0_7] : memref<16x128xf32, #tpu.memory_space<vmem>>, vector<16x128xf32>
    tpu.vector_store %arg8[%c0_6, %c0_7], %8 {strides = array<i32>} : memref<16x128xf32, #tpu.memory_space<vmem>>, vector<16x128xf32>,
    %c0_i32_8 = arith.constant 0 : i32
    %10 = arith.cmpi eq, %arg2, %c0_i32_8 : i32
    %11 = arith.extui %10 : i1 to i32
    %c0_i32_9 = arith.constant 0 : i32
    %12 = arith.cmpi ne, %11, %c0_i32_9 : i32
    scf.if %12 {
      %c0_10 = arith.constant 0 : index
      %c0_11 = arith.constant 0 : index
      %13 = vector.load %arg8[%c0_10, %c0_11] : memref<16x128xf32, #tpu.memory_space<vmem>>, vector<16x128xf32>
      %c0_12 = arith.constant 0 : index
      %c0_13 = arith.constant 0 : index
      %14 = vector.load %arg5[%c0_12, %c0_13] : memref<1x128xf32, #tpu.memory_space<vmem>>, vector<1x128xf32>
      %15 = vector.broadcast %14 : vector<1x128xf32> to vector<16x128xf32>
      %16 = arith.mulf %13, %15 : vector<16x128xf32>
      %c0_14 = arith.constant 0 : index
      %c0_15 = arith.constant 0 : index
      %17 = vector.load %arg6[%c0_14, %c0_15] : memref<1x128xf32, #tpu.memory_space<vmem>>, vector<1x128xf32>
      %18 = vector.broadcast %17 : vector<1x128xf32> to vector<16x128xf32>
      %19 = arith.addf %16, %18 : vector<16x128xf32>
      %c0_16 = arith.constant 0 : index
      %c0_17 = arith.constant 0 : index
      %20 = vector.load %arg7[%c0_16, %c0_17] : memref<16x128xf32, #tpu.memory_space<vmem>>, vector<16x128xf32>
      tpu.vector_store %arg7[%c0_16, %c0_17], %19 {strides = array<i32>} : memref<16x128xf32, #tpu.memory_space<vmem>>, vector<16x128xf32>,
    } else {
    }
    return
  }
  func.func @transform_0(%arg0: i32, %arg1: i32, %arg2: i32) -> (i32, i32) {
    %c0_i32 = arith.constant 0 : i32
    return %arg0, %arg2 : i32, i32
  }
  func.func @transform_1(%arg0: i32, %arg1: i32, %arg2: i32) -> (i32, i32) {
    %c0_i32 = arith.constant 0 : i32
    return %arg2, %arg1 : i32, i32
  }
  func.func @transform_2(%arg0: i32, %arg1: i32, %arg2: i32) -> (i32, i32) {
    %c0_i32 = arith.constant 0 : i32
    %c0_i32_0 = arith.constant 0 : i32
    return %c0_i32, %arg1 : i32, i32
  }
  func.func @transform_3(%arg0: i32, %arg1: i32, %arg2: i32) -> (i32, i32) {
    %c0_i32 = arith.constant 0 : i32
    %c0_i32_0 = arith.constant 0 : i32
    return %c0_i32, %arg1 : i32, i32
  }
  func.func @transform_4(%arg0: i32, %arg1: i32, %arg2: i32) -> (i32, i32) {
    %c0_i32 = arith.constant 0 : i32
    return %arg0, %arg1 : i32, i32
  }
}

</mosaic_0001>

<llo_original>
// kernel: tpu_custom_call.1
$region0: #{tpu_custom_call.1}
  #allocation0 [shape = 'u32[]', space=smem, size = 0x4, offset = 0x4, fixed_abs, tag = 'smem constant byte address 0x4 - core index']
  #allocation1 [shape = 'u32[72,128]{1,0:T(1,128)}', space=vmem, size = 0x9000, scoped, tag = 'internal scratch']
  #allocation2 [shape = 'f32[16,128]{1,0:T(8,128)}', space=vmem, size = 0x2000, scoped, tag = 'scratch operand']
  %s0 = inlined_call_operand.hbm [shape: bf16[16,128], index: 0, kind: input, shape index: {}]
  %s1 = inlined_call_operand.hbm [shape: s8[128,256], index: 1, kind: input, shape index: {}]
  %s2 = inlined_call_operand.hbm [shape: f32[1,256], index: 2, kind: input, shape index: {}]
  %s3 = inlined_call_operand.vmem [shape: f32[1,256], index: 3, kind: input, shape index: {}]
  %s4 = inlined_call_operand.hbm [shape: f32[16,256], index: 4, kind: output, shape index: {}]
  %s5 = sld [smem:[#allocation0]]
  $region69: #{tpu_custom_call.1} parent=0
    _
  %s7 = ssub.s32 1, %s5
  %s8 = scalar_select 0, %s7, %s5
  $region1: #{tpu_custom_call.1} parent=0
    #allocation3 [shape = 'u8[4096]{0}', space=vmem, size = 0x1000, scoped, tag = 'input window, operand 0, single buffered']
    #allocation4 [shape = 's32[2]{0}', space=sflag, size = 0x8, scoped, tag = 'scoped memory for tpu_custom_call.1']
    #allocation5 [shape = 's32[2]{0}', space=sflag, size = 0x8, scoped, tag = 'scoped memory for tpu_custom_call.1']
    #allocation6 [shape = 'u8[32768]{0}', space=vmem, size = 0x8000, scoped, tag = 'input window, operand 1']
    #allocation7 [shape = 's32[2]{0}', space=sflag, size = 0x8, scoped, tag = 'scoped memory for tpu_custom_call.1']
    #allocation8 [shape = 'u8[1024]{0}', space=vmem, size = 0x400, scoped, tag = 'input window, operand 2']
    #allocation9 [shape = 'u8[16384]{0}', space=vmem, size = 0x4000, scoped, tag = 'output window, operand 0']
    %9 = vsyncpa [#allocation4], 0
    %10 = vsyncpa [#allocation7], 0
    %s11 = scalar_lea.sflag [#allocation7], 1
    %12 = vsyncpa %s11, 0
    %13 = vsyncpa [#allocation5], 0
    %s14 = scalar_lea.sflag [#allocation5], 1
    %15 = vsyncpa %s14, 0
    loop: start=0, step=1, limit=4
    $region2: #{tpu_custom_call.1} parent=1 // loop_pre_header
      _
    $region3: #{tpu_custom_call.1} parent=1 // loop_header
      %s17 = sphi 0, %s21
      %p18 = scmp.ge.s32.totalorder %s17, 4
      %s24 = sphi 0, %s43
      %s25 = sphi 0, %s39
      %s26 = sphi 0, %s35
      %s27 = sphi 0, %s24
      %s28 = sphi 0, %s25
      %s29 = sphi 0, %s26
      %s30 = sphi 0, %s27
      %s31 = sphi 0, %s28
      %s32 = sphi 0, %s29
      %s48 = sphi 0, %s50
      %s51 = sphi 0, %s48
      %s52 = sphi 0, %s51
      %s68 = sphi 0, %s52
      %s76 = sphi 0, %s78
      %s79 = sphi 0, %s76
      %s80 = sphi 0, %s79
      %s96 = sphi 0, %s80
      %s102 = sphi 0, %s104
      %s105 = sphi 0, %s102
      %s106 = sphi 0, %s105
      %s122 = sphi 0, %s106
      %s128 = sphi 0, %s130
      %s131 = sphi 0, %s128
      %s132 = sphi 0, %s131
      %s148 = sphi 0, %s132
      %s156 = sphi 0, %s158
      %s159 = sphi 0, %s156
      %s160 = sphi 0, %s159
      %s176 = sphi 0, %s160
    $region4: #{tpu_custom_call.1} parent=1 // loop_header_branch
      %20 = sbr.rel (%p18) target = $region8
    $region5: #{tpu_custom_call.1} parent=1 // loop_body
      %s22 = ssub.s32 %s17, 1
      %s23 = ssub.s32 %s17, 2
      %s33 = sadd.s32 1, %s26
      %p34 = scmp.ge.s32.totalorder %s33, 1
      %s35 = scalar_select %p34, 0, %s33
      %s36 = sadd.s32 1, %s25
      %s37 = scalar_select %p34, %s36, %s25
      %p38 = scmp.ge.s32.totalorder %s37, 2
      %s39 = scalar_select %p38, 0, %s37
      %s40 = sadd.s32 1, %s24
      %s41 = scalar_select %p38, %s40, %s24
      %p42 = scmp.ge.s32.totalorder %s41, 1
      %s43 = scalar_select %p42, 0, %s41
      %s44 = ssub.s32 %s24, %s43
      %s45 = ssub.s32 %s26, %s35
      %s46 = sor.u32 %s44, %s45
      %p47 = scmp.eq.s32.totalorder %s46, 0
      %s49 = sadd.s32 %s48, 1
      %s50 = scalar_select %p47, %s48, %s49
      %p53 = pneg %p47
      %p54 = scmp.eq.s32.totalorder %s17, 1
      %p55 = por %p53, %p54
      %p56 = scmp.ne.s32.totalorder %s48, %s51
      %p57 = scmp.eq.s32.totalorder %s17, 0
      %p58 = por %p56, %p57
      %p59 = scmp.ne.s32.totalorder %s48, %s51
      %p60 = scmp.eq.s32.totalorder %s22, 1
      %p61 = por %p59, %p60
      %p62 = scmp.ne.s32.totalorder %s51, %s52
      %p63 = scmp.eq.s32.totalorder %s22, 0
      %p64 = por %p62, %p63
      %p65 = scmp.ne.s32.totalorder %s51, %s52
      %p66 = scmp.eq.s32.totalorder %s23, 1
      %p67 = por %p65, %p66
      %p69 = scmp.ne.s32.totalorder %s52, %s68
      %p70 = scmp.eq.s32.totalorder %s23, 0
      %p71 = por %p69, %p70
      %s72 = ssub.s32 %s26, %s35
      %s73 = ssub.s32 %s25, %s39
      %s74 = sor.u32 %s72, %s73
      %p75 = scmp.eq.s32.totalorder %s74, 0
      %s77 = sadd.s32 %s76, 1
      %s78 = scalar_select %p75, %s76, %s77
      %p81 = pneg %p75
      %p82 = scmp.eq.s32.totalorder %s17, 1
      %p83 = por %p81, %p82
      %p84 = scmp.ne.s32.totalorder %s76, %s79
      %p85 = scmp.eq.s32.totalorder %s17, 0
      %p86 = por %p84, %p85
      %p87 = scmp.ne.s32.totalorder %s76, %s79
      %p88 = scmp.eq.s32.totalorder %s22, 1
      %p89 = por %p87, %p88
      %p90 = scmp.ne.s32.totalorder %s79, %s80
      %p91 = scmp.eq.s32.totalorder %s22, 0
      %p92 = por %p90, %p91
      %p93 = scmp.ne.s32.totalorder %s79, %s80
      %p94 = scmp.eq.s32.totalorder %s23, 1
      %p95 = por %p93, %p94
      %p97 = scmp.ne.s32.totalorder %s80, %s96
      %p98 = scmp.eq.s32.totalorder %s23, 0
      %p99 = por %p97, %p98
      %s100 = ssub.s32 %s25, %s39
      %p101 = scmp.eq.s32.totalorder %s100, 0
      %s103 = sadd.s32 %s102, 1
      %s104 = scalar_select %p101, %s102, %s103
      %p107 = pneg %p101
      %p108 = scmp.eq.s32.totalorder %s17, 1
      %p109 = por %p107, %p108
      %p110 = scmp.ne.s32.totalorder %s102, %s105
      %p111 = scmp.eq.s32.totalorder %s17, 0
      %p112 = por %p110, %p111
      %p113 = scmp.ne.s32.totalorder %s102, %s105
      %p114 = scmp.eq.s32.totalorder %s22, 1
      %p115 = por %p113, %p114
      %p116 = scmp.ne.s32.totalorder %s105, %s106
      %p117 = scmp.eq.s32.totalorder %s22, 0
      %p118 = por %p116, %p117
      %p119 = scmp.ne.s32.totalorder %s105, %s106
      %p120 = scmp.eq.s32.totalorder %s23, 1
      %p121 = por %p119, %p120
      %p123 = scmp.ne.s32.totalorder %s106, %s122
      %p124 = scmp.eq.s32.totalorder %s23, 0
      %p125 = por %p123, %p124
      %s126 = ssub.s32 %s25, %s39
      %p127 = scmp.eq.s32.totalorder %s126, 0
      %s129 = sadd.s32 %s128, 1
      %s130 = scalar_select %p127, %s128, %s129
      %p133 = pneg %p127
      %p134 = scmp.eq.s32.totalorder %s17, 1
      %p135 = por %p133, %p134
      %p136 = scmp.ne.s32.totalorder %s128, %s131
      %p137 = scmp.eq.s32.totalorder %s17, 0
      %p138 = por %p136, %p137
      %p139 = scmp.ne.s32.totalorder %s128, %s131
      %p140 = scmp.eq.s32.totalorder %s22, 1
      %p141 = por %p139, %p140
      %p142 = scmp.ne.s32.totalorder %s131, %s132
      %p143 = scmp.eq.s32.totalorder %s22, 0
      %p144 = por %p142, %p143
      %p145 = scmp.ne.s32.totalorder %s131, %s132
      %p146 = scmp.eq.s32.totalorder %s23, 1
      %p147 = por %p145, %p146
      %p149 = scmp.ne.s32.totalorder %s132, %s148
      %p150 = scmp.eq.s32.totalorder %s23, 0
      %p151 = por %p149, %p150
      %s152 = ssub.s32 %s24, %s43
      %s153 = ssub.s32 %s25, %s39
      %s154 = sor.u32 %s152, %s153
      %p155 = scmp.eq.s32.totalorder %s154, 0
      %s157 = sadd.s32 %s156, 1
      %s158 = scalar_select %p155, %s156, %s157
      %p161 = pneg %p155
      %p162 = scmp.eq.s32.totalorder %s17, 1
      %p163 = por %p161, %p162
      %p164 = scmp.ne.s32.totalorder %s156, %s159
      %p165 = scmp.eq.s32.totalorder %s17, 0
      %p166 = por %p164, %p165
      %p167 = scmp.ne.s32.totalorder %s156, %s159
      %p168 = scmp.eq.s32.totalorder %s22, 1
      %p169 = por %p167, %p168
      %p170 = scmp.ne.s32.totalorder %s159, %s160
      %p171 = scmp.eq.s32.totalorder %s22, 0
      %p172 = por %p170, %p171
      %p173 = scmp.ne.s32.totalorder %s159, %s160
      %p174 = scmp.eq.s32.totalorder %s23, 1
      %p175 = por %p173, %p174
      %p177 = scmp.ne.s32.totalorder %s160, %s176
      %p178 = scmp.eq.s32.totalorder %s23, 0
      %p179 = por %p177, %p178
      %p180 = scmp.le.s32.totalorder 1, %s17
      %p181 = scmp.lt.s32.totalorder %s17, 3
      %p182 = pnand %p180, %p181
      %p183 = pneg %p182
      // Predicated region
      $region9: #{tpu_custom_call.1} parent=5 // pred_check
        _
      $region10: #{tpu_custom_call.1} parent=5 // pred_check_branch
        %185 = sbr.rel (%p182) target = $region12
      $region11: #{tpu_custom_call.1} parent=5 // pred_region
        %s186 = ssub.s32 %s17, 1
        // Predicated region
        $region13: #{tpu_custom_call.1} parent=11 // pred_check
          %p187 = pneg %p64
        $region14: #{tpu_custom_call.1} parent=11 // pred_check_branch
          %189 = sbr.rel (%p187) target = $region16
        $region15: #{tpu_custom_call.1} parent=11 // pred_region
          %s190 = smul.u32 2, %s27
          %192 = vsyncadd [#allocation4], 0
          %s193 = sadd.s32 %s29, %s190
          %s194 = smul.addr %s193, 4
          %s195 = scalar_lea.hbm %s0, %s194
          %s196 = sshll.u32 %s195, 4
          %s197 = int_to_ptr.hbm [resolvable:$true] %s196
          %s198 = sshll.u32 [#allocation3], 4
          %s199 = int_to_ptr.vmem [resolvable:$true] %s198
          %204 = dma.hbm_to_vmem [thread:$0]  %s197, 128, %s199, [#allocation4], 64, 64, 4
        $region16: #{tpu_custom_call.1} parent=11 // pred_fallthru
          _
      $region12: #{tpu_custom_call.1} parent=5 // pred_fallthru
        _
      %p205 = scmp.lt.s32.totalorder %s17, 2
      // Predicated region
      $region17: #{tpu_custom_call.1} parent=5 // pred_check
        %p206 = pneg %p205
      $region18: #{tpu_custom_call.1} parent=5 // pred_check_branch
        %208 = sbr.rel (%p206) target = $region20
      $region19: #{tpu_custom_call.1} parent=5 // pred_region
        // Predicated region
        $region21: #{tpu_custom_call.1} parent=19 // pred_check
          %p209 = pneg %p86
        $region22: #{tpu_custom_call.1} parent=19 // pred_check_branch
          %211 = sbr.rel (%p209) target = $region24
        $region23: #{tpu_custom_call.1} parent=19 // pred_region
          %s212 = sand.u32 %s17, 1
          %s213 = scalar_lea.sflag [#allocation7], %s212
          %s214 = sand.u32 %s76, 1
          %s215 = smul.addr %s214, 32
          %s216 = scalar_lea.vmem [#allocation6], %s215
          %s217 = smul.u32 4, %s26
          %219 = vsyncadd %s213, 0
          %s220 = smul.addr %s217, 2
          %s221 = sadd.s32 %s25, %s220
          %s222 = smul.addr %s221, 8
          %s223 = scalar_lea.hbm %s1, %s222
          %s224 = sshll.u32 %s223, 4
          %s225 = int_to_ptr.hbm [resolvable:$true] %s224
          %s226 = sshll.u32 %s216, 4
          %s227 = int_to_ptr.vmem [resolvable:$true] %s226
          %232 = dma.hbm_to_vmem [thread:$0]  %s225, 512, %s227, %s213, 256, 128, 8
        $region24: #{tpu_custom_call.1} parent=19 // pred_fallthru
          _
        // Predicated region
        $region25: #{tpu_custom_call.1} parent=19 // pred_check
          %p233 = pneg %p112
        $region26: #{tpu_custom_call.1} parent=19 // pred_check_branch
          %235 = sbr.rel (%p233) target = $region28
        $region27: #{tpu_custom_call.1} parent=19 // pred_region
          %s236 = sand.u32 %s17, 1
          %s237 = scalar_lea.sflag [#allocation7], %s236
          %s238 = sand.u32 %s102, 1
          %s239 = scalar_lea.vmem [#allocation8], %s238
          %241 = vsyncadd %s237, 0
          %s242 = scalar_lea.hbm %s2, %s25
          %s244 = sshll.u32 %s242, 4
          %s245 = int_to_ptr.hbm [resolvable:$true] %s244
          %s246 = sshll.u32 %s239, 4
          %s247 = int_to_ptr.vmem [resolvable:$true] %s246
          %249 = dma.hbm_to_vmem [thread:$0]  %s245, 16, %s247, %s237
        $region28: #{tpu_custom_call.1} parent=19 // pred_fallthru
          _
        // Predicated region
        $region29: #{tpu_custom_call.1} parent=19 // pred_check
          %p250 = pneg %p138
        $region30: #{tpu_custom_call.1} parent=19 // pred_check_branch
          %252 = sbr.rel (%p250) target = $region32
        $region31: #{tpu_custom_call.1} parent=19 // pred_region
          %p253 = scmp.lt.s32.totalorder %s25, 1
          %s254 = scalar_select %p253, %s25, 1
          %s255 = scalar_lea.vmem %s3, %s254
        $region32: #{tpu_custom_call.1} parent=19 // pred_fallthru
          _
      $region20: #{tpu_custom_call.1} parent=5 // pred_fallthru
        _
      %p256 = scmp.le.s32.totalorder 1, %s17
      %p257 = scmp.lt.s32.totalorder %s17, 3
      %p258 = pnand %p256, %p257
      %p259 = pneg %p258
      // Predicated region
      $region33: #{tpu_custom_call.1} parent=5 // pred_check
        _
      $region34: #{tpu_custom_call.1} parent=5 // pred_check_branch
        %261 = sbr.rel (%p258) target = $region36
      $region35: #{tpu_custom_call.1} parent=5 // pred_region
        %s262 = ssub.s32 %s17, 1
        // Predicated region
        $region37: #{tpu_custom_call.1} parent=35 // pred_check
          %p263 = pneg %p64
        $region38: #{tpu_custom_call.1} parent=35 // pred_check_branch
          %265 = sbr.rel (%p263) target = $region40
        $region39: #{tpu_custom_call.1} parent=35 // pred_region
          %267 = dma.done [#allocation4], 128
        $region40: #{tpu_custom_call.1} parent=35 // pred_fallthru
          _
        %s268 = sand.u32 %s22, 1
        %s269 = scalar_lea.sflag [#allocation7], %s268
        %s270 = sand.u32 %s79, 1
        %s271 = smul.addr %s270, 32
        %s272 = scalar_lea.vmem [#allocation6], %s271
        // Predicated region
        $region41: #{tpu_custom_call.1} parent=35 // pred_check
          %p273 = pneg %p92
        $region42: #{tpu_custom_call.1} parent=35 // pred_check_branch
          %275 = sbr.rel (%p273) target = $region44
        $region43: #{tpu_custom_call.1} parent=35 // pred_region
          %277 = dma.done %s269, 512
        $region44: #{tpu_custom_call.1} parent=35 // pred_fallthru
          _
        %s278 = sand.u32 %s22, 1
        %s279 = scalar_lea.sflag [#allocation7], %s278
        %s280 = sand.u32 %s105, 1
        %s281 = scalar_lea.vmem [#allocation8], %s280
        // Predicated region
        $region45: #{tpu_custom_call.1} parent=35 // pred_check
          %p282 = pneg %p118
        $region46: #{tpu_custom_call.1} parent=35 // pred_check_branch
          %284 = sbr.rel (%p282) target = $region48
        $region47: #{tpu_custom_call.1} parent=35 // pred_region
          %286 = dma.done %s279, 16
        $region48: #{tpu_custom_call.1} parent=35 // pred_fallthru
          _
        %p287 = pneg %p64
        %p288 = pneg %p61
        %s289 = sand.u32 %s22, 1
        %s290 = scalar_lea.sflag [#allocation7], %s289
        %s291 = sand.u32 %s79, 1
        %s292 = smul.addr %s291, 32
        %s293 = scalar_lea.vmem [#allocation6], %s292
        %p294 = pneg %p92
        %p295 = pneg %p89
        %s296 = sand.u32 %s22, 1
        %s297 = scalar_lea.sflag [#allocation7], %s296
        %s298 = sand.u32 %s105, 1
        %s299 = scalar_lea.vmem [#allocation8], %s298
        %p300 = pneg %p118
        %p301 = pneg %p115
        %p302 = scmp.lt.s32.totalorder %s28, 1
        %s303 = scalar_select %p302, %s28, 1
        %s304 = scalar_lea.vmem %s3, %s303
        %p305 = pneg %p144
        %p306 = pneg %p141
        %p307 = pneg %p172
        %p308 = pneg %p169
        %s309 = sand.u32 %s159, 1
        %s310 = scalar_lea.sflag [#allocation5], %s309
        %s311 = sand.u32 %s159, 1
        %s312 = smul.addr %s311, 16
        %s313 = scalar_lea.vmem [#allocation9], %s312
        %s314 = smul.u32 2, %s27
        %s315 = smul.u32 4, %s29
        %p316 = scmp.lt.s32.totalorder %s28, 1
        %s317 = scalar_select %p316, %s28, 1
        %s318 = scalar_lea.vmem %s3, %s317
        %s319 = smul.u32 2, %s27
        %p320 = scmp.eq.s32.totalorder %s29, 0
        // Predicated region
        $region49: #{tpu_custom_call.1} parent=35 // pred_check
          %p321 = pneg %p320
        $region50: #{tpu_custom_call.1} parent=35 // pred_check_branch
          %323 = sbr.rel (%p321) target = $region52
        $region51: #{tpu_custom_call.1} parent=35 // pred_region
          %324 = vst [vmem:[#allocation2] sm:$0xff] 0.0
          %325 = vst [vmem:[#allocation2 + $0x8] sm:$0xff] 0.0
        $region52: #{tpu_custom_call.1} parent=35 // pred_fallthru
          _
        %v326 = vld [vmem:[%s272] sm:$0xff]
        %v327 = vld [vmem:[%s272 + $0x8] sm:$0xff]
        %v328 = vld [vmem:[%s272 + $0x10] sm:$0xff]
        %v329 = vld [vmem:[%s272 + $0x18] sm:$0xff]
        %v330 = vunpack.c.0.s8 %v326
        %v331 = vunpack.c.1.s8 %v326
        %v332 = vunpack.c.2.s8 %v326
        %v333 = vunpack.c.3.s8 %v326
        %v334 = vunpack.c.0.s8 %v327
        %v335 = vunpack.c.1.s8 %v327
        %v336 = vunpack.c.2.s8 %v327
        %v337 = vunpack.c.3.s8 %v327
        %v338 = vunpack.c.0.s8 %v328
        %v339 = vunpack.c.1.s8 %v328
        %v340 = vunpack.c.2.s8 %v328
        %v341 = vunpack.c.3.s8 %v328
        %v342 = vunpack.c.0.s8 %v329
        %v343 = vunpack.c.1.s8 %v329
        %v344 = vunpack.c.2.s8 %v329
        %v345 = vunpack.c.3.s8 %v329
        %v346 = vcvt.s32.f32 %v330
        %v347 = vcvt.s32.f32 %v331
        %v348 = vcvt.s32.f32 %v332
        %v349 = vcvt.s32.f32 %v333
        %v350 = vcvt.s32.f32 %v334
        %v351 = vcvt.s32.f32 %v335
        %v352 = vcvt.s32.f32 %v336
        %v353 = vcvt.s32.f32 %v337
        %v354 = vcvt.s32.f32 %v338
        %v355 = vcvt.s32.f32 %v339
        %v356 = vcvt.s32.f32 %v340
        %v357 = vcvt.s32.f32 %v341
        %v358 = vcvt.s32.f32 %v342
        %v359 = vcvt.s32.f32 %v343
        %v360 = vcvt.s32.f32 %v344
        %v361 = vcvt.s32.f32 %v345
        %v362 = vpack.c.bf16 %v347, %v346
        %v363 = vpack.c.bf16 %v349, %v348
        %v364 = vpack.c.bf16 %v351, %v350
        %v365 = vpack.c.bf16 %v353, %v352
        %v366 = vpack.c.bf16 %v355, %v354
        %v367 = vpack.c.bf16 %v357, %v356
        %v368 = vpack.c.bf16 %v359, %v358
        %v369 = vpack.c.bf16 %v361, %v360
        %v370 = vld [vmem:[#allocation2] sm:$0xff]
        %v371 = vld [vmem:[#allocation2 + $0x8] sm:$0xff]
        %v372 = vld [vmem:[#allocation3] sm:$0xf]
        %v373 = vld [vmem:[#allocation3 + $0x4] sm:$0xf]
        %v376 = vunpack.c.l.b16 %v372
        %v377 = vunpack.c.l.b16 %v373
        %v378 = vpack.c.b16 %v377, %v376
        %380 = vmatpush.bf16.msra.mxu0 %v369
        %381 = vmatpush.bf16.msra.mxu0 %v368
        %382 = vmatpush.bf16.msra.mxu0 %v367
        %383 = vmatpush.bf16.msra.mxu0 %v366
        %384 = vmatpush.bf16.msra.mxu0 %v365
        %385 = vmatpush.bf16.msra.mxu0 %v364
        %386 = vmatpush.bf16.msra.mxu0 %v363
        %387 = vmatpush.bf16.msra.mxu0 %v362
        %388 = vmatmul.bf16.gmra.mxu0 %v378
        %v389 = vpop.f32.mrf.mxu0
        %v390 = vadd.f32 0.0, %v389
        %v391 = vpop.f32.mrf.mxu0
        %v392 = vadd.f32 0.0, %v391
        %393 = vdwg.mxu0
        %v394 = vadd.f32 %v370, %v390
        %v395 = vadd.f32 %v371, %v392
        %396 = vst [vmem:[#allocation2] sm:$0xff] %v394
        %397 = vst [vmem:[#allocation2 + $0x8] sm:$0xff] %v395
        // Predicated region
        $region53: #{tpu_custom_call.1} parent=35 // pred_check
          %p398 = pneg %p320
        $region54: #{tpu_custom_call.1} parent=35 // pred_check_branch
          %400 = sbr.rel (%p398) target = $region56
        $region55: #{tpu_custom_call.1} parent=35 // pred_region
          %v401 = vld [vmem:[#allocation2] sm:$0xff]
          %v402 = vld [vmem:[#allocation2 + $0x8] sm:$0xff]
          %v403 = vld [vmem:[%s281] sm:$0x1]
          %v405 = vperm.slane %v403, 0
          %v407 = vmul.f32 %v401, %v405
          %v408 = vmul.f32 %v402, %v405
          %v409 = vld [vmem:[%s318] sm:$0x1]
          %v411 = vperm.slane %v409, 0
          %v413 = vadd.f32 %v407, %v411
          %v414 = vadd.f32 %v408, %v411
          %415 = vst [vmem:[%s313] sm:$0xff] %v413
          %416 = vst [vmem:[%s313 + $0x8] sm:$0xff] %v414
        $region56: #{tpu_custom_call.1} parent=35 // pred_fallthru
          _
        %s417 = sand.u32 %s159, 1
        %s418 = scalar_lea.sflag [#allocation5], %s417
        %s419 = sand.u32 %s159, 1
        %s420 = smul.addr %s419, 16
        %s421 = scalar_lea.vmem [#allocation9], %s420
        // Predicated region
        $region57: #{tpu_custom_call.1} parent=35 // pred_check
          %p422 = pneg %p169
        $region58: #{tpu_custom_call.1} parent=35 // pred_check_branch
          %424 = sbr.rel (%p422) target = $region60
        $region59: #{tpu_custom_call.1} parent=35 // pred_region
          %s425 = smul.u32 2, %s27
          %427 = vsyncadd %s418, 0
          %s428 = smul.addr %s425, 2
          %s429 = sadd.s32 %s28, %s428
          %s430 = smul.addr %s429, 8
          %s431 = scalar_lea.hbm %s4, %s430
          %s432 = sshll.u32 %s421, 4
          %s433 = int_to_ptr.vmem [resolvable:$true] %s432
          %s434 = sshll.u32 %s431, 4
          %s435 = int_to_ptr.hbm [resolvable:$true] %s434
          %440 = dma.vmem_to_hbm [thread:$0]  %s433, 256, %s435, %s418, 128, 256, 8
        $region60: #{tpu_custom_call.1} parent=35 // pred_fallthru
          _
      $region36: #{tpu_custom_call.1} parent=5 // pred_fallthru
        _
      %p441 = scmp.le.s32.totalorder 2, %s17
      // Predicated region
      $region61: #{tpu_custom_call.1} parent=5 // pred_check
        %p442 = pneg %p441
      $region62: #{tpu_custom_call.1} parent=5 // pred_check_branch
        %444 = sbr.rel (%p442) target = $region64
      $region63: #{tpu_custom_call.1} parent=5 // pred_region
        %s445 = ssub.s32 %s17, 2
        // Predicated region
        $region65: #{tpu_custom_call.1} parent=63 // pred_check
          %p446 = pneg %p175
        $region66: #{tpu_custom_call.1} parent=63 // pred_check_branch
          %448 = sbr.rel (%p446) target = $region68
        $region67: #{tpu_custom_call.1} parent=63 // pred_region
          %s449 = sand.u32 %s160, 1
          %s450 = scalar_lea.sflag [#allocation5], %s449
          %s451 = sand.u32 %s160, 1
          %s452 = smul.addr %s451, 16
          %s453 = scalar_lea.vmem [#allocation9], %s452
          %455 = dma.done %s450, 256
        $region68: #{tpu_custom_call.1} parent=63 // pred_fallthru
          _
      $region64: #{tpu_custom_call.1} parent=5 // pred_fallthru
        _
    $region6: #{tpu_custom_call.1} parent=1 // loop_footer
      %s21 = sadd.s32 1, %s17
    $region7: #{tpu_custom_call.1} parent=1 // loop_footer_branch
      %16 = sbr.rel target = $region3
    $region8: #{tpu_custom_call.1} parent=1 // loop_exit
      _
    %456 = vsyncpa [#allocation4], 1
    %s457 = scalar_lea.sflag [#allocation4], 1
    %458 = vsyncpa %s457, 1
    %459 = vsyncpa [#allocation7], 1
    %s460 = scalar_lea.sflag [#allocation7], 1
    %461 = vsyncpa %s460, 1
    %462 = vsyncpa [#allocation5], 1
    %s463 = scalar_lea.sflag [#allocation5], 1
    %464 = vsyncpa %s463, 1

</llo_original>
